<compile_context>
chip_gen: v7x
topology: tpu7x:2x2x1
jax: 0.10.0
libtpu: 0.0.40
codegen_flags: <defaults>
</compile_context>

<pallas_src>
import jax
import jax.numpy as jnp
from jax.experimental import pallas as pl
from jax.experimental.pallas import tpu as pltpu


def _kata_gpool_kernel(x_ref, mask_ref, msum_ref, out_ref):
    """One grid step over NB batches.

    x_ref    : (NB, C, HW)   activations (native dtype; cast to f32 in-kernel)
    mask_ref : (NB, 1, HW)
    msum_ref : (NB, 1, 1)
    out_ref  : (NB, 3, C)    row 0 = mean, row 1 = mean*scale, row 2 = max
    """
    nb, c, hw = x_ref.shape
    x = x_ref[...].astype(jnp.float32)                        # (NB, C, HW)
    mask = mask_ref[...].astype(jnp.float32)                  # (NB, 1, HW)
    msum = msum_ref[...].reshape(nb, 1).astype(jnp.float32)   # (NB, 1)

    # Spatial sum on the MXU (otherwise idle): (NB*C, HW) @ (HW, 128), lane 0.
    # The reshape keeps the minor axis so it is layout-preserving whenever C is
    # a multiple of 8 (the usual case for real nets); otherwise the repack is a
    # tiny VMEM-local copy.
    ones = jnp.ones((hw, 128), jnp.float32)
    layer_sum = jnp.dot(
        x.reshape(nb * c, hw), ones, preferred_element_type=jnp.float32
    )[:, 0].reshape(nb, c)                                    # (NB, C)

    # Max over HW (XLU cross-lane reduce); matches torch: max over x+(mask-1).
    layer_max = jnp.max(x + (mask - 1.0), axis=-1)            # (NB, C)

    layer_mean = layer_sum / msum                             # (NB, C)
    scale = (jnp.sqrt(msum) - 14.0) / 10.0                    # (NB, 1)

    # All three stores start at lane 0 -> aligned, unmasked vector stores.
    out_ref[:, 0, :] = layer_mean
    out_ref[:, 1, :] = layer_mean * scale
    out_ref[:, 2, :] = layer_max


def _device_kind():
    try:
        return jax.devices()[0].device_kind.lower()
    except Exception:
        return ""


def _vmem_capacity_bytes():
    """Physical VMEM per TensorCore (v5e/v6e: 128 MiB, v7x: 64 MiB)."""
    try:
        return int(pltpu.get_tpu_info().vmem_capacity_bytes)
    except Exception:
        kind = _device_kind()
        return (64 << 20) if ("v7" in kind or "tpu7" in kind) else (128 << 20)


def _num_tensorcores():
    kind = _device_kind()
    return 2 if ("v7" in kind or "tpu7" in kind) else 1


def _estimate_vmem_bytes_per_batch(c, hw, itemsize):
    """Per-batch VMEM cost of one grid step, plus fixed overhead."""
    hw_pad = ((hw + 127) // 128) * 128
    c_pad = ((c + 7) // 8) * 8
    in_bytes = (c_pad + 8) * hw_pad * itemsize               # x rows + mask row (1 buffer)
    tmp_bytes = 2 * c_pad * hw_pad * 4 + c_pad * 128 * 4     # f32 cast, x+(mask-1), MXU result
    per_batch = 2 * in_bytes + tmp_bytes                     # double-buffered inputs + temps
    fixed = hw_pad * 128 * 4 + (1 << 20)                     # ones matrix + outputs + slop
    return per_batch, fixed


def _pick_batch_block(n, c, hw, itemsize, vmem_capacity, num_cores):
    """Choose batches-per-grid-step (NB) and any batch padding needed."""
    per_batch, fixed = _estimate_vmem_bytes_per_batch(c, hw, itemsize)
    # Per-step budget: half of physical VMEM minus headroom (v7x: ~24 MiB,
    # v5e/v6e: capped at 48 MiB) — keeps the DMA saturated with room for the
    # in-kernel f32 temporaries.
    budget = min(48 << 20, (vmem_capacity - (16 << 20)) // 2)
    nb = max(1, int((budget - fixed) // per_batch))
    # Target >= 4 grid steps per TensorCore so the pipeline overlaps DMA with
    # compute on every generation (v7x shards the "parallel" grid over 2 TCs).
    min_grid = 4 * num_cores
    nb = max(1, min(nb, n // min_grid, n))
    # Prefer a divisor of n (no batch padding) unless it halves the block.
    for d in range(nb, 0, -1):
        if n % d == 0 and d >= max(1, nb // 2):
            return d, 0
    return nb, (-n) % nb


def kata_gpool(x, mask, mask_sum_hw, *, block_batches=None):
    """Pallas implementation of KataGPool.forward (NCHW in, (N, 3C, 1, 1) f32 out)."""
    n, c, h, w = x.shape
    hw = h * w

    # No wrapper-side upcast / pad: pass activations in their native dtype
    # (bf16 halves the dominant HBM read; the kernel casts to f32 internally).
    # TODO(synk): if the surrounding model can emit channels-last (N, HW, C) or
    # a 128-padded HW layout for free, retile to shrink the remaining XLU max
    # reduce; a wrapper-side transpose/pad would add a full HBM pass on a
    # memory-bound op, so it is deliberately not done here.
    x_f = x.reshape(n, c, hw)
    m_f = mask.reshape(n, 1, hw)
    s_f = mask_sum_hw.reshape(n, 1, 1)

    vmem_capacity = _vmem_capacity_bytes()
    if block_batches is None:
        nb, pad = _pick_batch_block(n, c, hw, x_f.dtype.itemsize,
                                    vmem_capacity, _num_tensorcores())
    else:
        nb = int(max(1, min(block_batches, n)))
        pad = (-n) % nb

    if pad:
        # Rare fallback (n has no good divisor); msum padded with 1.0 so the
        # dropped rows stay finite.
        x_f = jnp.pad(x_f, ((0, pad), (0, 0), (0, 0)))
        m_f = jnp.pad(m_f, ((0, pad), (0, 0), (0, 0)))
        s_f = jnp.pad(s_f, ((0, pad), (0, 0), (0, 0)), constant_values=1.0)
    n_p = n + pad

    # Scoped-VMEM request: estimated usage (double-buffered inputs + in-kernel
    # f32 temporaries) plus headroom, never above physical capacity (v7x-safe).
    per_batch, fixed = _estimate_vmem_bytes_per_batch(c, hw, x_f.dtype.itemsize)
    vmem_limit = int(min(max(32 << 20, nb * per_batch + fixed + (8 << 20)),
                         vmem_capacity - (8 << 20)))

    out = pl.pallas_call(
        _kata_gpool_kernel,
        out_shape=jax.ShapeDtypeStruct((n_p, 3, c), jnp.float32),
        grid_spec=pltpu.PrefetchScalarGridSpec(
            num_scalar_prefetch=0,
            grid=(n_p // nb,),
            in_specs=[
                pl.BlockSpec((nb, c, hw), lambda i: (i, 0, 0)),
                pl.BlockSpec((nb, 1, hw), lambda i: (i, 0, 0)),
                # TODO(synk): mask_sum could ride the SMEM scalar-prefetch path,
                # but SMEM access is scalar-only and NB can be large, so the
                # 4*NB-byte VMEM DMA per step is kept (negligible next to x).
                pl.BlockSpec((nb, 1, 1), lambda i: (i, 0, 0)),
            ],
            out_specs=pl.BlockSpec((nb, 3, c), lambda i: (i, 0, 0)),
        ),
        compiler_params=pltpu.CompilerParams(
            dimension_semantics=("parallel",),
            vmem_limit_bytes=vmem_limit,
        ),
    )(x_f, m_f, s_f)

    # Row-major reshape of (N, 3, C) -> (N, 3C, 1, 1) preserves the torch.cat
    # order (mean | mean*scale | max), so this costs nothing.
    return out[:n].reshape(n, 3 * c, 1, 1)


def _reference(x, mask, mask_sum_hw):
    """Pure-JAX transcription of the PyTorch forward (for validation)."""
    n, c, h, w = x.shape
    sqrt_off = jnp.sqrt(mask_sum_hw) - 14.0
    layer_mean = jnp.sum(x.astype(jnp.float32), axis=(2, 3), keepdims=True) / mask_sum_hw
    layer_max = jnp.max(
        (x + (mask - 1.0)).reshape(n, c, -1).astype(jnp.float32), axis=2
    ).reshape(n, c, 1, 1)
    return jnp.concatenate(
        (layer_mean, layer_mean * (sqrt_off / 10.0), layer_max), axis=1)


def _make_inputs(key, n, c, h, w, board_sizes):
    x = jax.random.normal(key, (n, c, h, w), dtype=jnp.float32)
    rows = jnp.arange(h)[None, None, :, None]
    cols = jnp.arange(w)[None, None, None, :]
    lim = jnp.asarray(board_sizes, dtype=jnp.int32)[:, None, None, None]
    mask = ((rows < lim) & (cols < lim)).astype(jnp.float32)   # (n,1,h,w)
    x = x * mask                                               # zero padded area
    mask_sum = jnp.sum(mask, axis=(2, 3), keepdims=True)       # (n,1,1,1)
    return x, mask, mask_sum


def _check(name, x, mask, msum, **kw):
    out = jax.block_until_ready(kata_gpool(x, mask, msum, **kw))
    ref = _reference(x, mask, msum)
    assert out.shape == ref.shape, (name, out.shape, ref.shape)
    err = float(jnp.max(jnp.abs(out - ref)))
    assert jnp.allclose(out, ref, atol=1e-5, rtol=1e-5), (
        f"{name}: mismatch vs reference, max abs err {err}")


if __name__ == "__main__":
    key = jax.random.PRNGKey(0)
    k1, k2, k3 = jax.random.split(key, 3)

    # Primary small-shape check (N=2, C=4, 16x16 board).
    x, m, s = _make_inputs(k1, 2, 4, 16, 16, [12, 16])
    _check("n2", x, m, s)

    # Odd batch count, C multiple of 8 (exercises the MXU-sum path cleanly).
    x, m, s = _make_inputs(k2, 5, 8, 16, 16, [9, 13, 16, 7, 11])
    _check("n5", x, m, s)

    # Forced multi-batch block + batch-padding path (NB=2, N=5 -> pad 1).
    x, m, s = _make_inputs(k3, 5, 4, 8, 8, [5, 8, 6, 7, 4])
    _check("n5_nb2", x, m, s, block_batches=2)

    print("KERNEL_OK")
</pallas_src>

<mosaic_0001>
module attributes {stable_mosaic.version = 11 : i64} {
  func.func @_kata_gpool_kernel(%arg0: i32, %arg1: memref<1x4x256xf32, #tpu.memory_space<vmem>>, %arg2: memref<1x1x256xf32, #tpu.memory_space<vmem>>, %arg3: memref<1x1x1xf32, #tpu.memory_space<vmem>>, %arg4: memref<1x3x4xf32, #tpu.memory_space<vmem>>) attributes {dimension_semantics = [#tpu.dimension_semantics<parallel>], iteration_bounds = array<i64: 2>, scalar_prefetch = 0 : i64, scratch_operands = 0 : i64, tpu.core_type = #tpu.core_type<tc>, window_params = [{transform_indices = @transform_0, window_bounds = array<i64: 1, 4, 256>}, {transform_indices = @transform_1, window_bounds = array<i64: 1, 1, 256>}, {transform_indices = @transform_2, window_bounds = array<i64: 1, 1, 1>}, {transform_indices = @transform_3, window_bounds = array<i64: 1, 3, 4>}]} {
    %c0 = arith.constant 0 : index
    %c0_0 = arith.constant 0 : index
    %c0_1 = arith.constant 0 : index
    %0 = vector.load %arg1[%c0, %c0_0, %c0_1] : memref<1x4x256xf32, #tpu.memory_space<vmem>>, vector<1x4x256xf32>
    %c0_2 = arith.constant 0 : index
    %c0_3 = arith.constant 0 : index
    %c0_4 = arith.constant 0 : index
    %1 = vector.load %arg2[%c0_2, %c0_3, %c0_4] : memref<1x1x256xf32, #tpu.memory_space<vmem>>, vector<1x1x256xf32>
    %c0_5 = arith.constant 0 : index
    %c0_6 = arith.constant 0 : index
    %c0_7 = arith.constant 0 : index
    %2 = vector.load %arg3[%c0_5, %c0_6, %c0_7] : memref<1x1x1xf32, #tpu.memory_space<vmem>>, vector<1x1x1xf32>
    %3 = vector.shape_cast %2 : vector<1x1x1xf32> to vector<1x1xf32>
    %cst = arith.constant 1.000000e+00 : f32
    %4 = vector.broadcast %cst : f32 to vector<256x128xf32>
    %5 = vector.shape_cast %0 : vector<1x4x256xf32> to vector<4x256xf32>
    %cst_8 = arith.constant dense<0.000000e+00> : vector<4x128xf32>
    %6 = tpu.matmul %5, %4, %cst_8 {dimension_numbers = #tpu.dot_dimension_numbers<[1], [0], [0], [1], [0, 0, 1, 1], [], []>} : vector<4x256xf32>, vector<256x128xf32>, vector<4x128xf32> -> vector<4x128xf32>
    %7 = vector.extract_strided_slice %6 {offsets = [0, 0], sizes = [4, 1], strides = [1, 1]} : vector<4x128xf32> to vector<4x1xf32>
    %8 = vector.shape_cast %7 : vector<4x1xf32> to vector<4xf32>
    %9 = vector.shape_cast %8 : vector<4xf32> to vector<1x4xf32>
    %cst_9 = arith.constant 1.000000e+00 : f32
    %10 = vector.broadcast %cst_9 : f32 to vector<1x1x256xf32>
    %11 = arith.subf %1, %10 : vector<1x1x256xf32>
    %12 = vector.broadcast %11 : vector<1x1x256xf32> to vector<1x4x256xf32>
    %13 = arith.addf %0, %12 : vector<1x4x256xf32>
    %cst_10 = arith.constant dense<0xFF800000> : vector<1x4xf32>
    %14 = vector.multi_reduction <maximumf>, %13, %cst_10 [2] : vector<1x4x256xf32> to vector<1x4xf32>
    %15 = vector.broadcast %3 : vector<1x1xf32> to vector<1x4xf32>
    %16 = arith.divf %9, %15 : vector<1x4xf32>
    %17 = math.sqrt %3 : vector<1x1xf32>
    %cst_11 = arith.constant 1.400000e+01 : f32
    %18 = vector.broadcast %cst_11 : f32 to vector<1x1xf32>
    %19 = arith.subf %17, %18 : vector<1x1xf32>
    %cst_12 = arith.constant 1.000000e+01 : f32
    %20 = vector.broadcast %cst_12 : f32 to vector<1x1xf32>
    %21 = arith.divf %19, %20 : vector<1x1xf32>
    %c0_13 = arith.constant 0 : index
    %c0_14 = arith.constant 0 : index
    %c0_15 = arith.constant 0 : index
    %22 = vector.load %arg4[%c0_13, %c0_14, %c0_15] : memref<1x3x4xf32, #tpu.memory_space<vmem>>, vector<1x1x4xf32>
    %23 = vector.shape_cast %22 : vector<1x1x4xf32> to vector<1x4xf32>
    %24 = vector.shape_cast %16 : vector<1x4xf32> to vector<1x1x4xf32>
    tpu.vector_store %arg4[%c0_13, %c0_14, %c0_15], %24 {strides = array<i32>} : memref<1x3x4xf32, #tpu.memory_space<vmem>>, vector<1x1x4xf32>,
    %25 = vector.broadcast %21 : vector<1x1xf32> to vector<1x4xf32>
    %26 = arith.mulf %16, %25 : vector<1x4xf32>
    %c0_16 = arith.constant 0 : index
    %c1 = arith.constant 1 : index
    %c0_17 = arith.constant 0 : index
    %27 = vector.load %arg4[%c0_16, %c1, %c0_17] : memref<1x3x4xf32, #tpu.memory_space<vmem>>, vector<1x1x4xf32>
    %28 = vector.shape_cast %27 : vector<1x1x4xf32> to vector<1x4xf32>
    %29 = vector.shape_cast %26 : vector<1x4xf32> to vector<1x1x4xf32>
    tpu.vector_store %arg4[%c0_16, %c1, %c0_17], %29 {strides = array<i32>} : memref<1x3x4xf32, #tpu.memory_space<vmem>>, vector<1x1x4xf32>,
    %c0_18 = arith.constant 0 : index
    %c2 = arith.constant 2 : index
    %c0_19 = arith.constant 0 : index
    %30 = vector.load %arg4[%c0_18, %c2, %c0_19] : memref<1x3x4xf32, #tpu.memory_space<vmem>>, vector<1x1x4xf32>
    %31 = vector.shape_cast %30 : vector<1x1x4xf32> to vector<1x4xf32>
    %32 = vector.shape_cast %14 : vector<1x4xf32> to vector<1x1x4xf32>
    tpu.vector_store %arg4[%c0_18, %c2, %c0_19], %32 {strides = array<i32>} : memref<1x3x4xf32, #tpu.memory_space<vmem>>, vector<1x1x4xf32>,
    return
  }
  func.func @transform_0(%arg0: i32) -> (i32, i32, i32) {
    %c0_i32 = arith.constant 0 : i32
    %c0_i32_0 = arith.constant 0 : i32
    %c0_i32_1 = arith.constant 0 : i32
    return %arg0, %c0_i32, %c0_i32_0 : i32, i32, i32
  }
  func.func @transform_1(%arg0: i32) -> (i32, i32, i32) {
    %c0_i32 = arith.constant 0 : i32
    %c0_i32_0 = arith.constant 0 : i32
    %c0_i32_1 = arith.constant 0 : i32
    return %arg0, %c0_i32, %c0_i32_0 : i32, i32, i32
  }
  func.func @transform_2(%arg0: i32) -> (i32, i32, i32) {
    %c0_i32 = arith.constant 0 : i32
    %c0_i32_0 = arith.constant 0 : i32
    %c0_i32_1 = arith.constant 0 : i32
    return %arg0, %c0_i32, %c0_i32_0 : i32, i32, i32
  }
  func.func @transform_3(%arg0: i32) -> (i32, i32, i32) {
    %c0_i32 = arith.constant 0 : i32
    %c0_i32_0 = arith.constant 0 : i32
    %c0_i32_1 = arith.constant 0 : i32
    return %arg0, %c0_i32, %c0_i32_0 : i32, i32, i32
  }
}

</mosaic_0001>

<llo_original>
// kernel: tpu_custom_call.1
$region0: #{tpu_custom_call.1}
  #allocation0 [shape = 'u32[]', space=smem, size = 0x4, offset = 0x4, fixed_abs, tag = 'smem constant byte address 0x4 - core index']
  #allocation1 [shape = 'u32[144,128]{1,0:T(1,128)}', space=vmem, size = 0x12000, scoped, tag = 'internal scratch']
  %s0 = inlined_call_operand.hbm [shape: f32[2,4,256], index: 0, kind: input, shape index: {}]
  %s1 = inlined_call_operand.vmem [shape: f32[2,1,256], index: 1, kind: input, shape index: {}]
  %s2 = inlined_call_operand.vmem [shape: f32[2,1,1], index: 2, kind: input, shape index: {}]
  %s3 = inlined_call_operand.vmem [shape: f32[2,3,4], index: 3, kind: output, shape index: {}]
  %s4 = sld [smem:[#allocation0]]
  $region49: #{tpu_custom_call.1} parent=0
    _
  %s6 = ssub.s32 1, %s4
  %s7 = scalar_select 0, %s6, %s4
  $region1: #{tpu_custom_call.1} parent=0
    #allocation2 [shape = 'u8[8192]{0}', space=vmem, size = 0x2000, scoped, tag = 'input window, operand 0']
    #allocation3 [shape = 's32[2]{0}', space=sflag, size = 0x8, scoped, tag = 'scoped memory for tpu_custom_call.1']
    %8 = vsyncpa [#allocation3], 0
    %s9 = scalar_lea.sflag [#allocation3], 1
    %10 = vsyncpa %s9, 0
    loop: start=0, step=1, limit=4
    $region2: #{tpu_custom_call.1} parent=1 // loop_pre_header
      _
    $region3: #{tpu_custom_call.1} parent=1 // loop_header
      %s12 = sphi 0, %s16
      %p13 = scmp.ge.s32.totalorder %s12, 4
      %s22 = sphi 0, %s24
      %s25 = sphi 0, %s22
      %s26 = sphi 0, %s25
      %s42 = sphi 0, %s26
      %s48 = sphi 0, %s50
      %s51 = sphi 0, %s48
      %s52 = sphi 0, %s51
      %s68 = sphi 0, %s52
      %s74 = sphi 0, %s76
      %s77 = sphi 0, %s74
      %s78 = sphi 0, %s77
      %s94 = sphi 0, %s78
      %s100 = sphi 0, %s102
      %s103 = sphi 0, %s100
      %s104 = sphi 0, %s103
      %s120 = sphi 0, %s104
    $region4: #{tpu_custom_call.1} parent=1 // loop_header_branch
      %15 = sbr.rel (%p13) target = $region8
    $region5: #{tpu_custom_call.1} parent=1 // loop_body
      %s17 = ssub.s32 %s12, 1
      %s18 = ssub.s32 %s12, 2
      %s19 = sadd.s32 %s12, 1
      %s20 = ssub.s32 %s12, %s19
      %p21 = scmp.eq.s32.totalorder %s20, 0
      %s23 = sadd.s32 %s22, 1
      %s24 = scalar_select %p21, %s22, %s23
      %p27 = pneg %p21
      %p28 = scmp.eq.s32.totalorder %s12, 1
      %p29 = por %p27, %p28
      %p30 = scmp.ne.s32.totalorder %s22, %s25
      %p31 = scmp.eq.s32.totalorder %s12, 0
      %p32 = por %p30, %p31
      %p33 = scmp.ne.s32.totalorder %s22, %s25
      %p34 = scmp.eq.s32.totalorder %s17, 1
      %p35 = por %p33, %p34
      %p36 = scmp.ne.s32.totalorder %s25, %s26
      %p37 = scmp.eq.s32.totalorder %s17, 0
      %p38 = por %p36, %p37
      %p39 = scmp.ne.s32.totalorder %s25, %s26
      %p40 = scmp.eq.s32.totalorder %s18, 1
      %p41 = por %p39, %p40
      %p43 = scmp.ne.s32.totalorder %s26, %s42
      %p44 = scmp.eq.s32.totalorder %s18, 0
      %p45 = por %p43, %p44
      %s46 = ssub.s32 %s12, %s19
      %p47 = scmp.eq.s32.totalorder %s46, 0
      %s49 = sadd.s32 %s48, 1
      %s50 = scalar_select %p47, %s48, %s49
      %p53 = pneg %p47
      %p54 = scmp.eq.s32.totalorder %s12, 1
      %p55 = por %p53, %p54
      %p56 = scmp.ne.s32.totalorder %s48, %s51
      %p57 = scmp.eq.s32.totalorder %s12, 0
      %p58 = por %p56, %p57
      %p59 = scmp.ne.s32.totalorder %s48, %s51
      %p60 = scmp.eq.s32.totalorder %s17, 1
      %p61 = por %p59, %p60
      %p62 = scmp.ne.s32.totalorder %s51, %s52
      %p63 = scmp.eq.s32.totalorder %s17, 0
      %p64 = por %p62, %p63
      %p65 = scmp.ne.s32.totalorder %s51, %s52
      %p66 = scmp.eq.s32.totalorder %s18, 1
      %p67 = por %p65, %p66
      %p69 = scmp.ne.s32.totalorder %s52, %s68
      %p70 = scmp.eq.s32.totalorder %s18, 0
      %p71 = por %p69, %p70
      %s72 = ssub.s32 %s12, %s19
      %p73 = scmp.eq.s32.totalorder %s72, 0
      %s75 = sadd.s32 %s74, 1
      %s76 = scalar_select %p73, %s74, %s75
      %p79 = pneg %p73
      %p80 = scmp.eq.s32.totalorder %s12, 1
      %p81 = por %p79, %p80
      %p82 = scmp.ne.s32.totalorder %s74, %s77
      %p83 = scmp.eq.s32.totalorder %s12, 0
      %p84 = por %p82, %p83
      %p85 = scmp.ne.s32.totalorder %s74, %s77
      %p86 = scmp.eq.s32.totalorder %s17, 1
      %p87 = por %p85, %p86
      %p88 = scmp.ne.s32.totalorder %s77, %s78
      %p89 = scmp.eq.s32.totalorder %s17, 0
      %p90 = por %p88, %p89
      %p91 = scmp.ne.s32.totalorder %s77, %s78
      %p92 = scmp.eq.s32.totalorder %s18, 1
      %p93 = por %p91, %p92
      %p95 = scmp.ne.s32.totalorder %s78, %s94
      %p96 = scmp.eq.s32.totalorder %s18, 0
      %p97 = por %p95, %p96
      %s98 = ssub.s32 %s12, %s19
      %p99 = scmp.eq.s32.totalorder %s98, 0
      %s101 = sadd.s32 %s100, 1
      %s102 = scalar_select %p99, %s100, %s101
      %p105 = pneg %p99
      %p106 = scmp.eq.s32.totalorder %s12, 1
      %p107 = por %p105, %p106
      %p108 = scmp.ne.s32.totalorder %s100, %s103
      %p109 = scmp.eq.s32.totalorder %s12, 0
      %p110 = por %p108, %p109
      %p111 = scmp.ne.s32.totalorder %s100, %s103
      %p112 = scmp.eq.s32.totalorder %s17, 1
      %p113 = por %p111, %p112
      %p114 = scmp.ne.s32.totalorder %s103, %s104
      %p115 = scmp.eq.s32.totalorder %s17, 0
      %p116 = por %p114, %p115
      %p117 = scmp.ne.s32.totalorder %s103, %s104
      %p118 = scmp.eq.s32.totalorder %s18, 1
      %p119 = por %p117, %p118
      %p121 = scmp.ne.s32.totalorder %s104, %s120
      %p122 = scmp.eq.s32.totalorder %s18, 0
      %p123 = por %p121, %p122
      %p124 = scmp.le.s32.totalorder 1, %s12
      %p125 = scmp.lt.s32.totalorder %s12, 3
      %p126 = pnand %p124, %p125
      %p127 = pneg %p126
      // Predicated region
      $region9: #{tpu_custom_call.1} parent=5 // pred_check
        _
      $region10: #{tpu_custom_call.1} parent=5 // pred_check_branch
        %129 = sbr.rel (%p126) target = $region12
      $region11: #{tpu_custom_call.1} parent=5 // pred_region
        %s130 = ssub.s32 %s12, 1
      $region12: #{tpu_custom_call.1} parent=5 // pred_fallthru
        _
      %p131 = scmp.lt.s32.totalorder %s12, 2
      // Predicated region
      $region13: #{tpu_custom_call.1} parent=5 // pred_check
        %p132 = pneg %p131
      $region14: #{tpu_custom_call.1} parent=5 // pred_check_branch
        %134 = sbr.rel (%p132) target = $region16
      $region15: #{tpu_custom_call.1} parent=5 // pred_region
        // Predicated region
        $region17: #{tpu_custom_call.1} parent=15 // pred_check
          %p135 = pneg %p32
        $region18: #{tpu_custom_call.1} parent=15 // pred_check_branch
          %137 = sbr.rel (%p135) target = $region20
        $region19: #{tpu_custom_call.1} parent=15 // pred_region
          %s138 = sand.u32 %s22, 1
          %s139 = scalar_lea.sflag [#allocation3], %s138
          %s140 = sand.u32 %s22, 1
          %s141 = smul.addr %s140, 8
          %s142 = scalar_lea.vmem [#allocation2], %s141
          %s144 = ssub.s32 128, 128
          %145 = vsyncadd %s139, %s144
          %s146 = smul.addr %s12, 2
          %s147 = smul.addr %s146, 64
          %s148 = scalar_lea.hbm %s0, %s147
          %s150 = sshll.u32 %s142, 4
          %s151 = int_to_ptr.vmem [resolvable:$true] %s150
          %153 = dma.hbm_to_vmem [thread:$0]  %s148, 128, %s151, %s139
        $region20: #{tpu_custom_call.1} parent=15 // pred_fallthru
          _
        // Predicated region
        $region21: #{tpu_custom_call.1} parent=15 // pred_check
          %p154 = pneg %p58
        $region22: #{tpu_custom_call.1} parent=15 // pred_check_branch
          %156 = sbr.rel (%p154) target = $region24
        $region23: #{tpu_custom_call.1} parent=15 // pred_region
          %p157 = scmp.lt.s32.totalorder %s12, 1
          %s158 = scalar_select %p157, %s12, 1
          %s159 = smul.addr %s158, 2
          %s160 = scalar_lea.vmem %s1, %s159
        $region24: #{tpu_custom_call.1} parent=15 // pred_fallthru
          _
        // Predicated region
        $region25: #{tpu_custom_call.1} parent=15 // pred_check
          %p161 = pneg %p84
        $region26: #{tpu_custom_call.1} parent=15 // pred_check_branch
          %163 = sbr.rel (%p161) target = $region28
        $region27: #{tpu_custom_call.1} parent=15 // pred_region
          %p164 = scmp.lt.s32.totalorder %s12, 1
          %s165 = scalar_select %p164, %s12, 1
          %s166 = scalar_lea.vmem %s2, %s165
        $region28: #{tpu_custom_call.1} parent=15 // pred_fallthru
          _
      $region16: #{tpu_custom_call.1} parent=5 // pred_fallthru
        _
      %p167 = scmp.le.s32.totalorder 1, %s12
      %p168 = scmp.lt.s32.totalorder %s12, 3
      %p169 = pnand %p167, %p168
      %p170 = pneg %p169
      // Predicated region
      $region29: #{tpu_custom_call.1} parent=5 // pred_check
        _
      $region30: #{tpu_custom_call.1} parent=5 // pred_check_branch
        %172 = sbr.rel (%p169) target = $region32
      $region31: #{tpu_custom_call.1} parent=5 // pred_region
        %s173 = ssub.s32 %s12, 1
        %s174 = sand.u32 %s25, 1
        %s175 = scalar_lea.sflag [#allocation3], %s174
        %s176 = sand.u32 %s25, 1
        %s177 = smul.addr %s176, 8
        %s178 = scalar_lea.vmem [#allocation2], %s177
        // Predicated region
        $region33: #{tpu_custom_call.1} parent=31 // pred_check
          %p179 = pneg %p38
        $region34: #{tpu_custom_call.1} parent=31 // pred_check_branch
          %181 = sbr.rel (%p179) target = $region36
        $region35: #{tpu_custom_call.1} parent=31 // pred_region
          %182 = dma.done %s175, 128
        $region36: #{tpu_custom_call.1} parent=31 // pred_fallthru
          _
        %s183 = sand.u32 %s25, 1
        %s184 = scalar_lea.sflag [#allocation3], %s183
        %s185 = sand.u32 %s25, 1
        %s186 = smul.addr %s185, 8
        %s187 = scalar_lea.vmem [#allocation2], %s186
        %p188 = pneg %p38
        %p189 = pneg %p35
        %p190 = scmp.lt.s32.totalorder %s17, 1
        %s191 = scalar_select %p190, %s17, 1
        %s192 = smul.addr %s191, 2
        %s193 = scalar_lea.vmem %s1, %s192
        %p194 = pneg %p64
        %p195 = pneg %p61
        %p196 = scmp.lt.s32.totalorder %s17, 1
        %s197 = scalar_select %p196, %s17, 1
        %s198 = scalar_lea.vmem %s2, %s197
        %p199 = pneg %p90
        %p200 = pneg %p87
        %p201 = pneg %p116
        %p202 = pneg %p113
        %p203 = scmp.lt.s32.totalorder %s17, 1
        %s204 = scalar_select %p203, %s17, 1
        %s205 = smul.addr %s204, 4
        %s206 = scalar_lea.vmem %s3, %s205
        %p207 = scmp.lt.s32.totalorder %s17, 1
        %s208 = scalar_select %p207, %s17, 1
        %s209 = smul.addr %s208, 2
        %s210 = scalar_lea.vmem %s1, %s209
        %p211 = scmp.lt.s32.totalorder %s17, 1
        %s212 = scalar_select %p211, %s17, 1
        %s213 = scalar_lea.vmem %s2, %s212
        %p214 = scmp.lt.s32.totalorder %s17, 1
        %s215 = scalar_select %p214, %s17, 1
        %s216 = smul.addr %s215, 4
        %s217 = scalar_lea.vmem %s3, %s216
        %v218 = vld [vmem:[%s178] sm:$0xff]
        %v219 = vld [vmem:[%s210] sm:$0x3]
        %v220 = vld [vmem:[%s213] sm:$0x1]
        %v222 = vcombine.high %v218, %v218
        %224 = vmatprep.subr.mxu0 0.0
        %225 = vmatpush1.msra.mxu0 1.0
        %226 = vmatprep.subr.mxu0 0.0
        %227 = vmatpush1.msra.mxu0 1.0
        %228 = vmatprep.subr.mxu0 0.0
        %229 = vmatpush1.msra.mxu0 1.0
        %230 = vmatprep.subr.mxu0 0.0
        %231 = vmatpush1.msra.mxu0 1.0
        %232 = vmatprep.subr.mxu0 0.0
        %233 = vmatpush1.msra.mxu0 1.0
        %234 = vmatprep.subr.mxu0 0.0
        %235 = vmatpush1.msra.mxu0 1.0
        %236 = vmatprep.subr.mxu0 0.0
        %237 = vmatpush1.msra.mxu0 1.0
        %238 = vmatprep.subr.mxu0 0.0
        %239 = vmatpush1.msra.mxu0 1.0
        %240 = vmatprep.subr.mxu0 0.0
        %241 = vmatpush1.msra.mxu0 1.0
        %242 = vmatprep.subr.mxu0 0.0
        %243 = vmatpush1.msra.mxu0 1.0
        %244 = vmatprep.subr.mxu0 0.0
        %245 = vmatpush1.msra.mxu0 1.0
        %246 = vmatprep.subr.mxu0 0.0
        %247 = vmatpush1.msra.mxu0 1.0
        %248 = vmatprep.subr.mxu0 0.0
        %249 = vmatpush1.msra.mxu0 1.0
        %250 = vmatprep.subr.mxu0 0.0
        %251 = vmatpush1.msra.mxu0 1.0
        %252 = vmatprep.subr.mxu0 0.0
        %253 = vmatpush1.msra.mxu0 1.0
        %254 = vmatprep.subr.mxu0 0.0
        %255 = vmatpush1.msra.mxu0 1.0
        %256 = vmatprep.subr.mxu0 0.0
        %257 = vmatpush1.msra.mxu0 1.0
        %258 = vmatprep.subr.mxu0 0.0
        %259 = vmatpush1.msra.mxu0 1.0
        %260 = vmatprep.subr.mxu0 0.0
        %261 = vmatpush1.msra.mxu0 1.0
        %262 = vmatprep.subr.mxu0 0.0
        %263 = vmatpush1.msra.mxu0 1.0
        %264 = vmatprep.subr.mxu0 0.0
        %265 = vmatpush1.msra.mxu0 1.0
        %266 = vmatprep.subr.mxu0 0.0
        %267 = vmatpush1.msra.mxu0 1.0
        %268 = vmatprep.subr.mxu0 0.0
        %269 = vmatpush1.msra.mxu0 1.0
        %270 = vmatprep.subr.mxu0 0.0
        %271 = vmatpush1.msra.mxu0 1.0
        %272 = vmatprep.subr.mxu0 0.0
        %273 = vmatpush1.msra.mxu0 1.0
        %274 = vmatprep.subr.mxu0 0.0
        %275 = vmatpush1.msra.mxu0 1.0
        %276 = vmatprep.subr.mxu0 0.0
        %277 = vmatpush1.msra.mxu0 1.0
        %278 = vmatprep.subr.mxu0 0.0
        %279 = vmatpush1.msra.mxu0 1.0
        %280 = vmatprep.subr.mxu0 0.0
        %281 = vmatpush1.msra.mxu0 1.0
        %282 = vmatprep.subr.mxu0 0.0
        %283 = vmatpush1.msra.mxu0 1.0
        %284 = vmatprep.subr.mxu0 0.0
        %285 = vmatpush1.msra.mxu0 1.0
        %286 = vmatprep.subr.mxu0 0.0
        %287 = vmatpush1.msra.mxu0 1.0
        %288 = vmatprep.mubr.f32.mxu0 %v222
        %289 = vmatmul.mubr.f32.gmra.mrb[0].mxu0 %v218
        %v290 = vpop.f32.mrb[0].mxu0
        %v291 = vadd.f32 0.0, %v290
        %v292 = vpop.f32.mrb[0].mxu0
        %293 = vdwg.mxu0
        %v294 = vsub.f32 %v219, 1.0
        %v296 = vlaneseq
        %v297 = vshrl.u32 %v296, 7
        %v298 = vsub.s32 0, %v297
        %v299 = vrot.slane %v294, %v298
        %v300 = vlaneseq
        %v301 = vshrl.u32 %v300, 7
        %v302 = vsub.s32 1, %v301
        %v303 = vrot.slane %v294, %v302
        %v304 = vcombine.low %v299, %v303
        %v306 = vadd.f32 %v218, %v304
        %v308 = vcombine.high %v306, %v306
        %vm310 = vcmask 1043456
        %v311 = vsel %vm310, %v306, -inf
        %v312 = vsel %vm310, %v308, -inf
        %v313 = vmax.f32 %v311, %v312
        %314 = vmax.xlane.f32.xlu0 %v313
        %v315 = vpop.xlane.xlu0 %314
        %317 = vset.pattern.permute.xlu0 0
        %318 = vperm.xlu0 %317, %v220
        %v319 = vpop.permute.xlu0 %318
        %v321 = vlaneseq
        %v322 = vshrl.u32 %v321, 7
        %v323 = vsub.s32 0, %v322
        %v324 = vrot.slane %v319, %v323
        %v325 = vrcp.pop %v324
        %v326 = vmul.f32 %v291, %v325
        %v327 = vrsqrt.pop %v220
        %v328 = vmul.f32 %v220, %v327
        %vm329 = vcmp.eq.f32.partialorder %v220, inf
        %v330 = vsel %vm329, %v220, %v328
        %vm331 = vcmp.eq.f32.partialorder %v220, 0.0
        %v332 = vand.u32 %v220, 2147483648
        %v333 = vsel %vm331, %v332, %v330
        %v334 = vsub.f32 %v333, 14.0
        %v335 = vrcp.pop 10.0
        %v336 = vmul.f32 %v334, %v335
        %338 = vset.pattern.permute.xlu0 0
        %339 = vperm.xlu0 %338, %v326
        %v340 = vpop.permute.xlu0 %339
        %v341 = vlaneseq
        %v342 = vand.u32 %v341, 127
        %v343 = vlaneseq
        %v344 = vshrl.u32 %v343, 7
        %v345 = vsub.s32 %v342, %v344
        %v346 = vrot.slane %v340, %v345
        %vm348 = vcmask 24576
        %349 = vst.msk [vmem:[%s217] sm:$0x1] %vm348, %v346
        %351 = vset.pattern.permute.xlu0 0
        %352 = vperm.xlu0 %351, %v336
        %v353 = vpop.permute.xlu0 %352
        %v355 = vlaneseq
        %v356 = vshrl.u32 %v355, 7
        %v357 = vsub.s32 0, %v356
        %v358 = vrot.slane %v353, %v357
        %v359 = vmul.f32 %v326, %v358
        %361 = vset.pattern.permute.xlu0 0
        %362 = vperm.xlu0 %361, %v359
        %v363 = vpop.permute.xlu0 %362
        %v364 = vlaneseq
        %v365 = vshrl.u32 %v364, 7
        %v366 = vsub.s32 %v342, %v365
        %v367 = vrot.slane %v363, %v366
        %369 = vst.msk [vmem:[%s217 + $0x1] sm:$0x1] %vm348, %v367
        %v371 = vlaneseq
        %v372 = vshrl.u32 %v371, 7
        %v373 = vsub.s32 %v342, %v372
        %v374 = vrot.slane %v315, %v373
        %376 = vst.msk [vmem:[%s217 + $0x2] sm:$0x1] %vm348, %v374
        %p377 = scmp.lt.s32.totalorder %s17, 1
        %s378 = scalar_select %p377, %s17, 1
        %s379 = smul.addr %s378, 4
        %s380 = scalar_lea.vmem %s3, %s379
        // Predicated region
        $region37: #{tpu_custom_call.1} parent=31 // pred_check
          %p381 = pneg %p113
        $region38: #{tpu_custom_call.1} parent=31 // pred_check_branch
          %383 = sbr.rel (%p381) target = $region40
        $region39: #{tpu_custom_call.1} parent=31 // pred_region
          _
        $region40: #{tpu_custom_call.1} parent=31 // pred_fallthru
          _
      $region32: #{tpu_custom_call.1} parent=5 // pred_fallthru
        _
      %p384 = scmp.le.s32.totalorder 2, %s12
      // Predicated region
      $region41: #{tpu_custom_call.1} parent=5 // pred_check
        %p385 = pneg %p384
      $region42: #{tpu_custom_call.1} parent=5 // pred_check_branch
        %387 = sbr.rel (%p385) target = $region44
      $region43: #{tpu_custom_call.1} parent=5 // pred_region
        %s388 = ssub.s32 %s12, 2
        // Predicated region
        $region45: #{tpu_custom_call.1} parent=43 // pred_check
          %p389 = pneg %p119
        $region46: #{tpu_custom_call.1} parent=43 // pred_check_branch
          %391 = sbr.rel (%p389) target = $region48
        $region47: #{tpu_custom_call.1} parent=43 // pred_region
          %p392 = scmp.lt.s32.totalorder %s18, 1
          %s393 = scalar_select %p392, %s18, 1
          %s394 = smul.addr %s393, 4
          %s395 = scalar_lea.vmem %s3, %s394
        $region48: #{tpu_custom_call.1} parent=43 // pred_fallthru
          _
      $region44: #{tpu_custom_call.1} parent=5 // pred_fallthru
        _
    $region6: #{tpu_custom_call.1} parent=1 // loop_footer
      %s16 = sadd.s32 1, %s12
    $region7: #{tpu_custom_call.1} parent=1 // loop_footer_branch
      %11 = sbr.rel target = $region3
    $region8: #{tpu_custom_call.1} parent=1 // loop_exit
      _
    %396 = vsyncpa [#allocation3], 1
    %s397 = scalar_lea.sflag [#allocation3], 1
    %398 = vsyncpa %s397, 1

</llo_original>
